<compile_context>
chip_gen: v6e
topology: v6e:2x2x1
jax: 0.10.0
libtpu: 0.0.40
codegen_flags: <defaults>
</compile_context>

<pallas_src>
import jax
import jax.numpy as jnp
from jax.experimental import pallas as pl
from jax.experimental.pallas import tpu as pltpu


def _mlp_kernel(x_ref, w1_ref, b1_ref, w2_ref, b2_ref, w3_ref, b3_ref, o_ref):
    """One batch-tile of the fused 3-layer MLP (weights are VMEM-resident)."""
    x = x_ref[...].astype(jnp.float32)                         # (TB, 4)

    # fc1 + ReLU
    h1 = jnp.dot(x, w1_ref[...].astype(jnp.float32),
                 preferred_element_type=jnp.float32)
    h1 = jnp.maximum(h1 + b1_ref[...].astype(jnp.float32), 0.0)   # (TB, 8)

    # fc2 + ReLU
    h2 = jnp.dot(h1, w2_ref[...].astype(jnp.float32),
                 preferred_element_type=jnp.float32)
    h2 = jnp.maximum(h2 + b2_ref[...].astype(jnp.float32), 0.0)   # (TB, 9)

    # out + ReLU
    y = jnp.dot(h2, w3_ref[...].astype(jnp.float32),
                preferred_element_type=jnp.float32)
    y = jnp.maximum(y + b3_ref[...].astype(jnp.float32), 0.0)     # (TB, 3)

    o_ref[...] = y.astype(o_ref.dtype)


def _round_up(n, m):
    return ((n + m - 1) // m) * m


def mlp_forward(x, params, *, block_batch=1024):
    """x: (batch, 4) float32. Returns (batch, 3) float32.

    block_batch: batch-tile size. Large tiles (512-8192, multiple of 8)
    amortize the ~0.35us per-grid-step overhead; clamped to the (8-aligned)
    batch for small inputs so the demo runs as a single step.
    """
    w1, b1, w2, b2, w3, b3 = params
    batch, nb_input = x.shape
    nb_output = w3.shape[1]

    # Batch tile: multiple of 8 (sublane), no larger than the padded batch.
    tb = min(_round_up(block_batch, 8), _round_up(batch, 8))
    padded = _round_up(batch, tb)
    if padded != batch:
        x = jnp.pad(x, ((0, padded - batch), (0, 0)))

    grid = (pl.cdiv(padded, tb),)

    # Whole-array, VMEM-resident specs for weights/biases: constant block
    # index -> no re-DMA across grid steps.
    def resident(a):
        zeros = tuple(0 for _ in a.shape)
        return pl.BlockSpec(a.shape, lambda i, _z=zeros: _z)

    flops = 2 * padded * (nb_input * w1.shape[1]
                          + w1.shape[1] * w2.shape[1]
                          + w2.shape[1] * nb_output)
    bytes_accessed = (padded * (nb_input + nb_output) * x.dtype.itemsize
                      + sum(int(a.size) * a.dtype.itemsize for a in params))

    out = pl.pallas_call(
        _mlp_kernel,
        out_shape=jax.ShapeDtypeStruct((padded, nb_output), jnp.float32),
        grid=grid,
        in_specs=[
            pl.BlockSpec((tb, nb_input), lambda i: (i, 0)),   # x: batch-tiled
            resident(w1), resident(b1),
            resident(w2), resident(b2),
            resident(w3), resident(b3),
        ],
        # TODO(synk): output lane width is 3 (<128) so stores are masked; a
        # lane-dense padded output slab would help only at very large batch.
        out_specs=pl.BlockSpec((tb, nb_output), lambda i: (i, 0)),
        compiler_params=pltpu.CompilerParams(
            dimension_semantics=("parallel",),        # shard batch over TCs (v7x)
            vmem_limit_bytes=32 * 1024 * 1024,        # safe on v7x's 64 MiB VMEM
        ),
        cost_estimate=pl.CostEstimate(
            flops=flops, transcendentals=0, bytes_accessed=bytes_accessed),
    )(x, w1, b1, w2, b2, w3, b3)

    if padded != batch:
        out = out[:batch]
    return out


def init_params(key, nb_input=4, nb_output=3):
    """Deterministic parameter init (same shapes as the PyTorch module)."""
    k1, k2, k3, k4, k5, k6 = jax.random.split(key, 6)
    # weights as (in, out) — transpose of torch's (out, in)
    w1 = jax.random.normal(k1, (nb_input, 8), jnp.float32) * 0.5
    b1 = jax.random.normal(k2, (1, 8), jnp.float32) * 0.1
    w2 = jax.random.normal(k3, (8, 9), jnp.float32) * 0.5
    b2 = jax.random.normal(k4, (1, 9), jnp.float32) * 0.1
    w3 = jax.random.normal(k5, (9, nb_output), jnp.float32) * 0.5
    b3 = jax.random.normal(k6, (1, nb_output), jnp.float32) * 0.1
    return (w1, b1, w2, b2, w3, b3)


def mlp_forward_ref(x, params):
    """Pure-JAX reference for correctness checking."""
    w1, b1, w2, b2, w3, b3 = params
    h1 = jnp.maximum(x @ w1 + b1, 0.0)
    h2 = jnp.maximum(h1 @ w2 + b2, 0.0)
    return jnp.maximum(h2 @ w3 + b3, 0.0)


if __name__ == "__main__":
    key = jax.random.PRNGKey(0)
    k_x, k_x2, k_p = jax.random.split(key, 3)

    nb_input, nb_output = 4, 3
    params = init_params(k_p, nb_input, nb_output)

    # Small demo batch (single grid step).
    batch = 8
    x = jax.random.normal(k_x, (batch, nb_input), jnp.float32)
    out = jax.block_until_ready(mlp_forward(x, params))
    ref = mlp_forward_ref(x, params)
    assert out.shape == (batch, nb_output)
    assert jnp.allclose(out, ref, atol=1e-5, rtol=1e-5)

    # Larger batch exercising the batch grid: 3 tiles of 128 rows + padding.
    batch2 = 300
    x2 = jax.random.normal(k_x2, (batch2, nb_input), jnp.float32)
    out2 = jax.block_until_ready(mlp_forward(x2, params, block_batch=128))
    ref2 = mlp_forward_ref(x2, params)
    assert out2.shape == (batch2, nb_output)
    assert jnp.allclose(out2, ref2, atol=1e-5, rtol=1e-5)

    print("KERNEL_OK")
</pallas_src>

<mosaic_0001>
module attributes {stable_mosaic.version = 11 : i64} {
  func.func @_mlp_kernel(%arg0: i32, %arg1: memref<8x4xf32, #tpu.memory_space<vmem>>, %arg2: memref<4x8xf32, #tpu.memory_space<vmem>>, %arg3: memref<1x8xf32, #tpu.memory_space<vmem>>, %arg4: memref<8x9xf32, #tpu.memory_space<vmem>>, %arg5: memref<1x9xf32, #tpu.memory_space<vmem>>, %arg6: memref<9x3xf32, #tpu.memory_space<vmem>>, %arg7: memref<1x3xf32, #tpu.memory_space<vmem>>, %arg8: memref<8x3xf32, #tpu.memory_space<vmem>>) attributes {dimension_semantics = [#tpu.dimension_semantics<parallel>], iteration_bounds = array<i64: 1>, scalar_prefetch = 0 : i64, scratch_operands = 0 : i64, tpu.core_type = #tpu.core_type<tc>, window_params = [{transform_indices = @transform_0, window_bounds = array<i64: 8, 4>}, {pipeline_mode = #tpu.pipeline_mode<synchronous>, transform_indices = @transform_1, window_bounds = array<i64: 4, 8>}, {pipeline_mode = #tpu.pipeline_mode<synchronous>, transform_indices = @transform_2, window_bounds = array<i64: 1, 8>}, {pipeline_mode = #tpu.pipeline_mode<synchronous>, transform_indices = @transform_3, window_bounds = array<i64: 8, 9>}, {pipeline_mode = #tpu.pipeline_mode<synchronous>, transform_indices = @transform_4, window_bounds = array<i64: 1, 9>}, {pipeline_mode = #tpu.pipeline_mode<synchronous>, transform_indices = @transform_5, window_bounds = array<i64: 9, 3>}, {pipeline_mode = #tpu.pipeline_mode<synchronous>, transform_indices = @transform_6, window_bounds = array<i64: 1, 3>}, {transform_indices = @transform_7, window_bounds = array<i64: 8, 3>}]} {
    %c0 = arith.constant 0 : index
    %c0_0 = arith.constant 0 : index
    %0 = vector.load %arg1[%c0, %c0_0] : memref<8x4xf32, #tpu.memory_space<vmem>>, vector<8x4xf32>
    %c0_1 = arith.constant 0 : index
    %c0_2 = arith.constant 0 : index
    %1 = vector.load %arg2[%c0_1, %c0_2] : memref<4x8xf32, #tpu.memory_space<vmem>>, vector<4x8xf32>
    %cst = arith.constant dense<0.000000e+00> : vector<8x8xf32>
    %2 = tpu.matmul %0, %1, %cst {dimension_numbers = #tpu.dot_dimension_numbers<[1], [0], [0], [1], [0, 0, 1, 1], [], []>} : vector<8x4xf32>, vector<4x8xf32>, vector<8x8xf32> -> vector<8x8xf32>
    %c0_3 = arith.constant 0 : index
    %c0_4 = arith.constant 0 : index
    %3 = vector.load %arg3[%c0_3, %c0_4] : memref<1x8xf32, #tpu.memory_space<vmem>>, vector<1x8xf32>
    %4 = vector.broadcast %3 : vector<1x8xf32> to vector<8x8xf32>
    %5 = arith.addf %2, %4 : vector<8x8xf32>
    %cst_5 = arith.constant 0.000000e+00 : f32
    %6 = vector.broadcast %cst_5 : f32 to vector<8x8xf32>
    %7 = arith.maximumf %5, %6 : vector<8x8xf32>
    %c0_6 = arith.constant 0 : index
    %c0_7 = arith.constant 0 : index
    %8 = vector.load %arg4[%c0_6, %c0_7] : memref<8x9xf32, #tpu.memory_space<vmem>>, vector<8x9xf32>
    %cst_8 = arith.constant dense<0.000000e+00> : vector<8x9xf32>
    %9 = tpu.matmul %7, %8, %cst_8 {dimension_numbers = #tpu.dot_dimension_numbers<[1], [0], [0], [1], [0, 0, 1, 1], [], []>} : vector<8x8xf32>, vector<8x9xf32>, vector<8x9xf32> -> vector<8x9xf32>
    %c0_9 = arith.constant 0 : index
    %c0_10 = arith.constant 0 : index
    %10 = vector.load %arg5[%c0_9, %c0_10] : memref<1x9xf32, #tpu.memory_space<vmem>>, vector<1x9xf32>
    %11 = vector.broadcast %10 : vector<1x9xf32> to vector<8x9xf32>
    %12 = arith.addf %9, %11 : vector<8x9xf32>
    %cst_11 = arith.constant 0.000000e+00 : f32
    %13 = vector.broadcast %cst_11 : f32 to vector<8x9xf32>
    %14 = arith.maximumf %12, %13 : vector<8x9xf32>
    %c0_12 = arith.constant 0 : index
    %c0_13 = arith.constant 0 : index
    %15 = vector.load %arg6[%c0_12, %c0_13] : memref<9x3xf32, #tpu.memory_space<vmem>>, vector<9x3xf32>
    %cst_14 = arith.constant dense<0.000000e+00> : vector<8x3xf32>
    %16 = tpu.matmul %14, %15, %cst_14 {dimension_numbers = #tpu.dot_dimension_numbers<[1], [0], [0], [1], [0, 0, 1, 1], [], []>} : vector<8x9xf32>, vector<9x3xf32>, vector<8x3xf32> -> vector<8x3xf32>
    %c0_15 = arith.constant 0 : index
    %c0_16 = arith.constant 0 : index
    %17 = vector.load %arg7[%c0_15, %c0_16] : memref<1x3xf32, #tpu.memory_space<vmem>>, vector<1x3xf32>
    %18 = vector.broadcast %17 : vector<1x3xf32> to vector<8x3xf32>
    %19 = arith.addf %16, %18 : vector<8x3xf32>
    %cst_17 = arith.constant 0.000000e+00 : f32
    %20 = vector.broadcast %cst_17 : f32 to vector<8x3xf32>
    %21 = arith.maximumf %19, %20 : vector<8x3xf32>
    %c0_18 = arith.constant 0 : index
    %c0_19 = arith.constant 0 : index
    %22 = vector.load %arg8[%c0_18, %c0_19] : memref<8x3xf32, #tpu.memory_space<vmem>>, vector<8x3xf32>
    tpu.vector_store %arg8[%c0_18, %c0_19], %21 {strides = array<i32>} : memref<8x3xf32, #tpu.memory_space<vmem>>, vector<8x3xf32>,
    return
  }
  func.func @transform_0(%arg0: i32) -> (i32, i32) {
    %c0_i32 = arith.constant 0 : i32
    %c0_i32_0 = arith.constant 0 : i32
    return %arg0, %c0_i32 : i32, i32
  }
  func.func @transform_1(%arg0: i32) -> (i32, i32) {
    %c0_i32 = arith.constant 0 : i32
    %c0_i32_0 = arith.constant 0 : i32
    %c0_i32_1 = arith.constant 0 : i32
    return %c0_i32, %c0_i32_0 : i32, i32
  }
  func.func @transform_2(%arg0: i32) -> (i32, i32) {
    %c0_i32 = arith.constant 0 : i32
    %c0_i32_0 = arith.constant 0 : i32
    %c0_i32_1 = arith.constant 0 : i32
    return %c0_i32, %c0_i32_0 : i32, i32
  }
  func.func @transform_3(%arg0: i32) -> (i32, i32) {
    %c0_i32 = arith.constant 0 : i32
    %c0_i32_0 = arith.constant 0 : i32
    %c0_i32_1 = arith.constant 0 : i32
    return %c0_i32, %c0_i32_0 : i32, i32
  }
  func.func @transform_4(%arg0: i32) -> (i32, i32) {
    %c0_i32 = arith.constant 0 : i32
    %c0_i32_0 = arith.constant 0 : i32
    %c0_i32_1 = arith.constant 0 : i32
    return %c0_i32, %c0_i32_0 : i32, i32
  }
  func.func @transform_5(%arg0: i32) -> (i32, i32) {
    %c0_i32 = arith.constant 0 : i32
    %c0_i32_0 = arith.constant 0 : i32
    %c0_i32_1 = arith.constant 0 : i32
    return %c0_i32, %c0_i32_0 : i32, i32
  }
  func.func @transform_6(%arg0: i32) -> (i32, i32) {
    %c0_i32 = arith.constant 0 : i32
    %c0_i32_0 = arith.constant 0 : i32
    %c0_i32_1 = arith.constant 0 : i32
    return %c0_i32, %c0_i32_0 : i32, i32
  }
  func.func @transform_7(%arg0: i32) -> (i32, i32) {
    %c0_i32 = arith.constant 0 : i32
    %c0_i32_0 = arith.constant 0 : i32
    return %arg0, %c0_i32 : i32, i32
  }
}

</mosaic_0001>

<llo_original>
// kernel: tpu_custom_call.1
$region0: #{tpu_custom_call.1}
  #allocation0 [shape = 'u32[]', space=smem, size = 0x4, offset = 0x4, fixed_abs, tag = 'smem constant byte address 0x4 - core index']
  #allocation1 [shape = 'u32[144,128]{1,0:T(1,128)}', space=vmem, size = 0x12000, scoped, tag = 'internal scratch']
  %s0 = inlined_call_operand.vmem [shape: f32[8,4], index: 0, kind: input, shape index: {}]
  %s1 = inlined_call_operand.vmem [shape: f32[4,8], index: 1, kind: input, shape index: {}]
  %s2 = inlined_call_operand.vmem [shape: f32[1,8], index: 2, kind: input, shape index: {}]
  %s3 = inlined_call_operand.vmem [shape: f32[8,9], index: 3, kind: input, shape index: {}]
  %s4 = inlined_call_operand.vmem [shape: f32[1,9], index: 4, kind: input, shape index: {}]
  %s5 = inlined_call_operand.vmem [shape: f32[9,3], index: 5, kind: input, shape index: {}]
  %s6 = inlined_call_operand.vmem [shape: f32[1,3], index: 6, kind: input, shape index: {}]
  %s7 = inlined_call_operand.vmem [shape: f32[8,3], index: 7, kind: output, shape index: {}]
  %s8 = sld [smem:[#allocation0]]
  $region38: #{tpu_custom_call.1} parent=0
    _
  %s10 = ssub.s32 1, %s8
  %s11 = scalar_select 0, %s10, %s8
  // Predicated region
  $region2: #{tpu_custom_call.1} parent=0 // pred_check
    _
  $region3: #{tpu_custom_call.1} parent=0 // pred_check_branch
    %13 = sbr.rel (0) target = $region5
  $region4: #{tpu_custom_call.1} parent=0 // pred_region
    _
  $region5: #{tpu_custom_call.1} parent=0 // pred_fallthru
    _
  // Predicated region
  $region6: #{tpu_custom_call.1} parent=0 // pred_check
    _
  $region7: #{tpu_custom_call.1} parent=0 // pred_check_branch
    %15 = sbr.rel (0) target = $region9
  $region8: #{tpu_custom_call.1} parent=0 // pred_region
    _
  $region9: #{tpu_custom_call.1} parent=0 // pred_fallthru
    _
  // Predicated region
  $region10: #{tpu_custom_call.1} parent=0 // pred_check
    _
  $region11: #{tpu_custom_call.1} parent=0 // pred_check_branch
    %17 = sbr.rel (0) target = $region13
  $region12: #{tpu_custom_call.1} parent=0 // pred_region
    _
  $region13: #{tpu_custom_call.1} parent=0 // pred_fallthru
    _
  // Predicated region
  $region14: #{tpu_custom_call.1} parent=0 // pred_check
    _
  $region15: #{tpu_custom_call.1} parent=0 // pred_check_branch
    %19 = sbr.rel (0) target = $region17
  $region16: #{tpu_custom_call.1} parent=0 // pred_region
    _
  $region17: #{tpu_custom_call.1} parent=0 // pred_fallthru
    _
  // Predicated region
  $region18: #{tpu_custom_call.1} parent=0 // pred_check
    _
  $region19: #{tpu_custom_call.1} parent=0 // pred_check_branch
    %21 = sbr.rel (0) target = $region21
  $region20: #{tpu_custom_call.1} parent=0 // pred_region
    _
  $region21: #{tpu_custom_call.1} parent=0 // pred_fallthru
    _
  // Predicated region
  $region22: #{tpu_custom_call.1} parent=0 // pred_check
    _
  $region23: #{tpu_custom_call.1} parent=0 // pred_check_branch
    %23 = sbr.rel (0) target = $region25
  $region24: #{tpu_custom_call.1} parent=0 // pred_region
    _
  $region25: #{tpu_custom_call.1} parent=0 // pred_fallthru
    _
  // Predicated region
  $region26: #{tpu_custom_call.1} parent=0 // pred_check
    _
  $region27: #{tpu_custom_call.1} parent=0 // pred_check_branch
    %25 = sbr.rel (0) target = $region29
  $region28: #{tpu_custom_call.1} parent=0 // pred_region
    _
  $region29: #{tpu_custom_call.1} parent=0 // pred_fallthru
    _
  %v26 = vld [vmem:[%s0] sm:$0xff]
  %v27 = vld [vmem:[%s1] sm:$0xf]
  %v28 = vld [vmem:[%s2] sm:$0x1]
  %v30 = vlaneseq
  %v31 = vshrl.u32 %v30, 7
  %v32 = vsub.s32 0, %v31
  %v33 = vrot.slane %v28, %v32
  %vm35 = vcmask 31744
  %v37 = vsel %vm35, %v26, 0
  %vm39 = vcmask 1043456
  %v41 = vsel %vm39, %v27, 0
  %43 = vmatprep.subr.mxu0 0.0
  %44 = vmatpush1.msra.mxu0 0.0
  %45 = vmatprep.subr.mxu0 0.0
  %46 = vmatpush1.msra.mxu0 0.0
  %47 = vmatprep.subr.mxu0 0.0
  %48 = vmatpush1.msra.mxu0 0.0
  %49 = vmatprep.subr.mxu0 0.0
  %50 = vmatpush1.msra.mxu0 0.0
  %51 = vmatprep.subr.mxu0 0.0
  %52 = vmatpush1.msra.mxu0 0.0
  %53 = vmatprep.subr.mxu0 0.0
  %54 = vmatpush1.msra.mxu0 0.0
  %55 = vmatprep.subr.mxu0 0.0
  %56 = vmatpush1.msra.mxu0 0.0
  %57 = vmatprep.subr.mxu0 0.0
  %58 = vmatpush1.msra.mxu0 0.0
  %59 = vmatprep.subr.mxu0 0.0
  %60 = vmatpush1.msra.mxu0 0.0
  %61 = vmatprep.subr.mxu0 0.0
  %62 = vmatpush1.msra.mxu0 0.0
  %63 = vmatprep.subr.mxu0 0.0
  %64 = vmatpush1.msra.mxu0 0.0
  %65 = vmatprep.subr.mxu0 0.0
  %66 = vmatpush1.msra.mxu0 0.0
  %67 = vmatprep.subr.mxu0 0.0
  %68 = vmatpush1.msra.mxu0 0.0
  %69 = vmatprep.subr.mxu0 0.0
  %70 = vmatpush1.msra.mxu0 0.0
  %71 = vmatprep.subr.mxu0 0.0
  %72 = vmatpush1.msra.mxu0 0.0
  %73 = vmatprep.subr.mxu0 0.0
  %74 = vmatpush1.msra.mxu0 %v41
  %75 = vmatprep.subr.mxu0 0.0
  %76 = vmatpush2.msra.mxu0 0.0
  %77 = vmatprep.subr.mxu0 0.0
  %78 = vmatpush2.msra.mxu0 0.0
  %79 = vmatprep.subr.mxu0 0.0
  %80 = vmatpush2.msra.mxu0 0.0
  %81 = vmatprep.subr.mxu0 0.0
  %82 = vmatpush2.msra.mxu0 0.0
  %83 = vmatprep.subr.mxu0 0.0
  %84 = vmatpush2.msra.mxu0 0.0
  %85 = vmatprep.subr.mxu0 0.0
  %86 = vmatpush2.msra.mxu0 0.0
  %87 = vmatprep.subr.mxu0 0.0
  %88 = vmatpush2.msra.mxu0 0.0
  %89 = vmatprep.subr.mxu0 0.0
  %90 = vmatpush2.msra.mxu0 0.0
  %91 = vmatprep.subr.mxu0 0.0
  %92 = vmatpush2.msra.mxu0 0.0
  %93 = vmatprep.subr.mxu0 0.0
  %94 = vmatpush2.msra.mxu0 0.0
  %95 = vmatprep.subr.mxu0 0.0
  %96 = vmatpush2.msra.mxu0 0.0
  %97 = vmatprep.subr.mxu0 0.0
  %98 = vmatpush2.msra.mxu0 0.0
  %99 = vmatprep.subr.mxu0 0.0
  %100 = vmatpush2.msra.mxu0 0.0
  %101 = vmatprep.subr.mxu0 0.0
  %102 = vmatpush2.msra.mxu0 0.0
  %103 = vmatprep.subr.mxu0 0.0
  %104 = vmatpush2.msra.mxu0 0.0
  %105 = vmatprep.subr.mxu0 0.0
  %106 = vmatpush2.msra.mxu0 0.0
  %107 = vmatprep.mubr.f32.mxu0 0.0
  %108 = vmatmul.mubr.f32.gmra.mxu0 %v37
  %v109 = vpop.f32.mrf.mxu0
  %v110 = vadd.f32 %v33, %v109
  %v111 = vpop.f32.mrf.mxu0
  %112 = vdwg.mxu0
  %v113 = vmax.f32 %v110, 0.0
  %v114 = vld [vmem:[%s3] sm:$0xff]
  %v115 = vld [vmem:[%s4] sm:$0x1]
  %v117 = vlaneseq
  %v118 = vshrl.u32 %v117, 7
  %v119 = vsub.s32 0, %v118
  %v120 = vrot.slane %v115, %v119
  %vm122 = vcmask 64512
  %v124 = vsel %vm122, %v113, 0
  %126 = vmatprep.subr.mxu0 0.0
  %127 = vmatpush1.msra.mxu0 0.0
  %128 = vmatprep.subr.mxu0 0.0
  %129 = vmatpush1.msra.mxu0 0.0
  %130 = vmatprep.subr.mxu0 0.0
  %131 = vmatpush1.msra.mxu0 0.0
  %132 = vmatprep.subr.mxu0 0.0
  %133 = vmatpush1.msra.mxu0 0.0
  %134 = vmatprep.subr.mxu0 0.0
  %135 = vmatpush1.msra.mxu0 0.0
  %136 = vmatprep.subr.mxu0 0.0
  %137 = vmatpush1.msra.mxu0 0.0
  %138 = vmatprep.subr.mxu0 0.0
  %139 = vmatpush1.msra.mxu0 0.0
  %140 = vmatprep.subr.mxu0 0.0
  %141 = vmatpush1.msra.mxu0 0.0
  %142 = vmatprep.subr.mxu0 0.0
  %143 = vmatpush1.msra.mxu0 0.0
  %144 = vmatprep.subr.mxu0 0.0
  %145 = vmatpush1.msra.mxu0 0.0
  %146 = vmatprep.subr.mxu0 0.0
  %147 = vmatpush1.msra.mxu0 0.0
  %148 = vmatprep.subr.mxu0 0.0
  %149 = vmatpush1.msra.mxu0 0.0
  %150 = vmatprep.subr.mxu0 0.0
  %151 = vmatpush1.msra.mxu0 0.0
  %152 = vmatprep.subr.mxu0 0.0
  %153 = vmatpush1.msra.mxu0 0.0
  %154 = vmatprep.subr.mxu0 0.0
  %155 = vmatpush1.msra.mxu0 0.0
  %156 = vmatprep.subr.mxu0 0.0
  %157 = vmatpush1.msra.mxu0 %v114
  %158 = vmatprep.subr.mxu0 0.0
  %159 = vmatpush2.msra.mxu0 0.0
  %160 = vmatprep.subr.mxu0 0.0
  %161 = vmatpush2.msra.mxu0 0.0
  %162 = vmatprep.subr.mxu0 0.0
  %163 = vmatpush2.msra.mxu0 0.0
  %164 = vmatprep.subr.mxu0 0.0
  %165 = vmatpush2.msra.mxu0 0.0
  %166 = vmatprep.subr.mxu0 0.0
  %167 = vmatpush2.msra.mxu0 0.0
  %168 = vmatprep.subr.mxu0 0.0
  %169 = vmatpush2.msra.mxu0 0.0
  %170 = vmatprep.subr.mxu0 0.0
  %171 = vmatpush2.msra.mxu0 0.0
  %172 = vmatprep.subr.mxu0 0.0
  %173 = vmatpush2.msra.mxu0 0.0
  %174 = vmatprep.subr.mxu0 0.0
  %175 = vmatpush2.msra.mxu0 0.0
  %176 = vmatprep.subr.mxu0 0.0
  %177 = vmatpush2.msra.mxu0 0.0
  %178 = vmatprep.subr.mxu0 0.0
  %179 = vmatpush2.msra.mxu0 0.0
  %180 = vmatprep.subr.mxu0 0.0
  %181 = vmatpush2.msra.mxu0 0.0
  %182 = vmatprep.subr.mxu0 0.0
  %183 = vmatpush2.msra.mxu0 0.0
  %184 = vmatprep.subr.mxu0 0.0
  %185 = vmatpush2.msra.mxu0 0.0
  %186 = vmatprep.subr.mxu0 0.0
  %187 = vmatpush2.msra.mxu0 0.0
  %188 = vmatprep.subr.mxu0 0.0
  %189 = vmatpush2.msra.mxu0 0.0
  %190 = vmatprep.mubr.f32.mxu0 0.0
  %191 = vmatmul.mubr.f32.gmra.mxu0 %v124
  %v192 = vpop.f32.mrf.mxu0
  %v193 = vadd.f32 %v120, %v192
  %v194 = vpop.f32.mrf.mxu0
  %195 = vdwg.mxu0
  %v196 = vmax.f32 %v193, 0.0
  %v197 = vld [vmem:[%s5] sm:$0xff]
  %v198 = vld [vmem:[%s5 + $0x8] sm:$0x1]
  %v199 = vld [vmem:[%s6] sm:$0x1]
  %v201 = vlaneseq
  %v202 = vshrl.u32 %v201, 7
  %v203 = vsub.s32 0, %v202
  %v204 = vrot.slane %v199, %v203
  %vm206 = vcmask 72704
  %v208 = vsel %vm206, %v196, 0
  %vm210 = vcmask 1040384
  %v212 = vsel %vm210, %v198, 0
  %214 = vmatprep.subr.mxu0 0.0
  %215 = vmatpush1.msra.mxu0 0.0
  %216 = vmatprep.subr.mxu0 0.0
  %217 = vmatpush1.msra.mxu0 0.0
  %218 = vmatprep.subr.mxu0 0.0
  %219 = vmatpush1.msra.mxu0 0.0
  %220 = vmatprep.subr.mxu0 0.0
  %221 = vmatpush1.msra.mxu0 0.0
  %222 = vmatprep.subr.mxu0 0.0
  %223 = vmatpush1.msra.mxu0 0.0
  %224 = vmatprep.subr.mxu0 0.0
  %225 = vmatpush1.msra.mxu0 0.0
  %226 = vmatprep.subr.mxu0 0.0
  %227 = vmatpush1.msra.mxu0 0.0
  %228 = vmatprep.subr.mxu0 0.0
  %229 = vmatpush1.msra.mxu0 0.0
  %230 = vmatprep.subr.mxu0 0.0
  %231 = vmatpush1.msra.mxu0 0.0
  %232 = vmatprep.subr.mxu0 0.0
  %233 = vmatpush1.msra.mxu0 0.0
  %234 = vmatprep.subr.mxu0 0.0
  %235 = vmatpush1.msra.mxu0 0.0
  %236 = vmatprep.subr.mxu0 0.0
  %237 = vmatpush1.msra.mxu0 0.0
  %238 = vmatprep.subr.mxu0 0.0
  %239 = vmatpush1.msra.mxu0 0.0
  %240 = vmatprep.subr.mxu0 0.0
  %241 = vmatpush1.msra.mxu0 0.0
  %242 = vmatprep.subr.mxu0 0.0
  %243 = vmatpush1.msra.mxu0 %v212
  %244 = vmatprep.subr.mxu0 0.0
  %245 = vmatpush1.msra.mxu0 %v197
  %246 = vmatprep.subr.mxu0 0.0
  %247 = vmatpush2.msra.mxu0 0.0
  %248 = vmatprep.subr.mxu0 0.0
  %249 = vmatpush2.msra.mxu0 0.0
  %250 = vmatprep.subr.mxu0 0.0
  %251 = vmatpush2.msra.mxu0 0.0
  %252 = vmatprep.subr.mxu0 0.0
  %253 = vmatpush2.msra.mxu0 0.0
  %254 = vmatprep.subr.mxu0 0.0
  %255 = vmatpush2.msra.mxu0 0.0
  %256 = vmatprep.subr.mxu0 0.0
  %257 = vmatpush2.msra.mxu0 0.0
  %258 = vmatprep.subr.mxu0 0.0
  %259 = vmatpush2.msra.mxu0 0.0
  %260 = vmatprep.subr.mxu0 0.0
  %261 = vmatpush2.msra.mxu0 0.0
  %262 = vmatprep.subr.mxu0 0.0
  %263 = vmatpush2.msra.mxu0 0.0
  %264 = vmatprep.subr.mxu0 0.0
  %265 = vmatpush2.msra.mxu0 0.0
  %266 = vmatprep.subr.mxu0 0.0
  %267 = vmatpush2.msra.mxu0 0.0
  %268 = vmatprep.subr.mxu0 0.0
  %269 = vmatpush2.msra.mxu0 0.0
  %270 = vmatprep.subr.mxu0 0.0
  %271 = vmatpush2.msra.mxu0 0.0
  %272 = vmatprep.subr.mxu0 0.0
  %273 = vmatpush2.msra.mxu0 0.0
  %274 = vmatprep.subr.mxu0 0.0
  %275 = vmatpush2.msra.mxu0 0.0
  %276 = vmatprep.subr.mxu0 0.0
  %277 = vmatpush2.msra.mxu0 0.0
  %278 = vmatprep.mubr.f32.mxu0 0.0
  %279 = vmatmul.mubr.f32.gmra.mxu0 %v208
  %v280 = vpop.f32.mrf.mxu0
  %v281 = vadd.f32 %v204, %v280
  %v282 = vpop.f32.mrf.mxu0
  %283 = vdwg.mxu0
  %v284 = vmax.f32 %v281, 0.0
  %vm285 = vcmask 23552
  %286 = vst.msk [vmem:[%s7] sm:$0xff] %vm285, %v284
  // Predicated region
  $region30: #{tpu_custom_call.1} parent=0 // pred_check
    _
  $region31: #{tpu_custom_call.1} parent=0 // pred_check_branch
    %288 = sbr.rel (0) target = $region33
  $region32: #{tpu_custom_call.1} parent=0 // pred_region
    _
  $region33: #{tpu_custom_call.1} parent=0 // pred_fallthru
    _
  // Predicated region
  $region34: #{tpu_custom_call.1} parent=0 // pred_check
    _
  $region35: #{tpu_custom_call.1} parent=0 // pred_check_branch
    %290 = sbr.rel (0) target = $region37
  $region36: #{tpu_custom_call.1} parent=0 // pred_region
    _
  $region37: #{tpu_custom_call.1} parent=0 // pred_fallthru
    _

</llo_original>
